<compile_context>
chip_gen: v7x
topology: tpu7x:2x2x1
jax: 0.10.0
libtpu: 0.0.40
codegen_flags: <defaults>
</compile_context>

<pallas_src>
import functools

import numpy as np
import jax
import jax.numpy as jnp
from jax.experimental import pallas as pl
from jax.experimental.pallas import tpu as pltpu

_EPS_NORM = 1e-12              # torch.nn.functional.normalize default eps
_EPS2 = _EPS_NORM * _EPS_NORM  # rsqrt(max(ss, eps^2)) == 1 / max(||f||, eps)


# --------------------------------------------------------------------------- kernel bodies
def _tile_cosine(q_ref, f_ref, ni, *, tn, n_true, use_mxu):
    """Cosine similarity s[b, n] = <f_hat[b,n,:], q_hat[n,:]> for one (tb, tn) tile.

    Template normalization is fused (the normalized copy is never built).  Patch columns
    past the true N (ragged last tile) are forced to exactly 0 with a select so any
    garbage from the clamped DMA region cannot propagate.  Returns (s, valid_mask|None).
    """
    f = f_ref[...]                                    # (tb, tn, D) — bf16 in the hot path
    tb, _, d = f.shape
    n_span = q_ref.shape[0]                           # n_blocks * tn (== n_true if no pad)

    if n_span == tn:                                  # single n-block: use whole resident q
        q = q_ref[...]
    else:
        start = pl.multiple_of(ni * tn, tn)
        q = q_ref[pl.ds(start, tn), :]                # (tn, D) slice of the resident query

    # bf16 VPU multiplies — no f32 copy of the (tb, tn, D) tile is materialized.
    p = f * q[None, :, :]                             # f . q   (per-element)
    p2 = f * f                                        # f . f   (per-element)

    if use_mxu:
        # Offload the D-axis adds to the MXU: matmul against a ones RHS with f32
        # accumulation.  All 128 result columns are identical, so a cheap lane-mean
        # (1/8th of the original reduce work) recovers the row sums.
        ones = jnp.ones((d, 128), dtype=p.dtype)
        r = jnp.dot(p.reshape(tb * tn, d), ones, preferred_element_type=jnp.float32)
        r2 = jnp.dot(p2.reshape(tb * tn, d), ones, preferred_element_type=jnp.float32)
        dot = jnp.sum(r.reshape(tb, tn, 128), axis=-1) * (1.0 / 128.0)    # (tb, tn) f32
        ss = jnp.sum(r2.reshape(tb, tn, 128), axis=-1) * (1.0 / 128.0)    # (tb, tn) f32
    else:
        # v5e path: no bf16 VALU anyway and the chip is HBM-bound, keep VPU reductions.
        dot = jnp.sum(p.astype(jnp.float32), axis=-1)
        ss = jnp.sum(p2.astype(jnp.float32), axis=-1)

    # fused F.normalize(f, dim=-1): divide-by-norm as rsqrt (EUP slot) * mul.
    s = dot * jax.lax.rsqrt(jnp.maximum(ss, _EPS2))

    valid = None
    if n_span > n_true or tn > n_true:                # ragged last n tile -> mask it
        patch = ni * tn + jax.lax.broadcasted_iota(jnp.int32, (tb, tn), 1)
        valid = patch < n_true
        s = jnp.where(valid, s, 0.0)                  # select: garbage/NaN cannot leak
    return s, valid


def _fine_score_kernel_mean(q_ref, f_ref, s_ref, num_acc, *, tn, n_true, inv_n, use_mxu):
    """mask_scores=False path: plain mean over the (true) N patches."""
    ni = pl.program_id(1)

    @pl.when(ni == 0)
    def _init():
        num_acc[...] = jnp.zeros_like(num_acc)

    s, _ = _tile_cosine(q_ref, f_ref, ni, tn=tn, n_true=n_true, use_mxu=use_mxu)
    num_acc[...] += jnp.sum(s, axis=-1, keepdims=True)          # (tb, 1)

    @pl.when(ni == pl.num_programs(1) - 1)
    def _finalize():
        s_ref[...] = num_acc[...] * inv_n                       # inv_n = 1 / true_N (static)


def _fine_score_kernel_weighted(q_ref, f_ref, w_ref, s_ref, num_acc, den_acc,
                                *, tn, n_true, use_mxu):
    """mask_scores=True path: weighted mean with the resized union mask."""
    ni = pl.program_id(1)

    @pl.when(ni == 0)
    def _init():
        num_acc[...] = jnp.zeros_like(num_acc)
        den_acc[...] = jnp.zeros_like(den_acc)

    s, valid = _tile_cosine(q_ref, f_ref, ni, tn=tn, n_true=n_true, use_mxu=use_mxu)
    w = w_ref[...].astype(jnp.float32)                          # (tb, tn)
    if valid is not None:
        w = jnp.where(valid, w, 0.0)                            # kill garbage in ragged tail
    num_acc[...] += jnp.sum(s * w, axis=-1, keepdims=True)
    den_acc[...] += jnp.sum(w, axis=-1, keepdims=True)

    @pl.when(ni == pl.num_programs(1) - 1)
    def _finalize():
        # Exact divide — runs once per view block, so approx buys nothing.
        # torch would produce NaN/inf for an all-zero resized mask; we return 0 instead.
        s_ref[...] = num_acc[...] / jnp.maximum(den_acc[...], 1e-6)


# --------------------------------------------------------------------------- wrapper
def _is_v5e():
    try:
        kind = jax.devices()[0].device_kind.lower()
        return ("v5 lite" in kind) or ("v5e" in kind) or ("v5litepod" in kind)
    except Exception:
        return False


def _choose_tn(n, d, tb, max_bytes, itemsize):
    """Pick the patch tile: full N if it fits (and keeps reshapes layout-preserving),
    otherwise the largest power-of-two multiple of 128 under the byte budget."""
    if n % 8 == 0 and tb * n * d * itemsize <= max_bytes:
        return n, 1
    tn = 128
    while tb * (tn * 2) * d * itemsize <= max_bytes and (tn * 2) < n:
        tn *= 2
    n_blocks = (n + tn - 1) // tn
    return tn, n_blocks


def pallas_view_scores(query_feat, feats, weights=None, tb=8, max_tile_bytes=None):
    """query_feat (N, D), feats (B, N, D), weights (B, N) or None -> scores (B,) f32."""
    feats = jnp.asarray(feats)
    B, N, D = feats.shape
    if B == 0:
        return jnp.zeros((0,), jnp.float32)

    # View-block size: B itself for tiny candidate sets (block dim == full dim, no ragged
    # b reads); otherwise a multiple of 8 so B>8 yields >=2 parallel blocks for megacore.
    if B <= 8:
        tb = B
    else:
        tb = max(8, (int(tb) // 8) * 8)

    # Pre-normalize the query ONCE in f32, store bf16 (the torch path runs in half).
    q = jnp.asarray(query_feat).astype(jnp.float32)
    qn = q * jax.lax.rsqrt(jnp.maximum(jnp.sum(q * q, axis=-1, keepdims=True), _EPS2))
    qn = qn.astype(jnp.bfloat16)

    # Generation-aware tile / scoped-VMEM targets.
    try:
        vmem_cap = int(pltpu.get_tpu_info().vmem_capacity_bytes)
    except Exception:
        vmem_cap = 64 << 20                        # conservative (v7x-sized) fallback
    if vmem_cap >= (100 << 20):                    # v5e / v6e: 128 MiB physical VMEM
        tile_budget, scoped_cap = 8 << 20, 96 << 20
    else:                                          # v7x: 64 MiB physical VMEM
        tile_budget, scoped_cap = 4 << 20, 44 << 20
    if max_tile_bytes is not None:                 # test / tuning override
        tile_budget = int(max_tile_bytes)

    itemsize = feats.dtype.itemsize
    tn, n_blocks = _choose_tn(N, D, tb, tile_budget, itemsize)
    n_span = n_blocks * tn
    b_blocks = (B + tb - 1) // tb

    # Only the tiny query is padded (so the in-kernel pl.ds slice stays in bounds).
    # The big (B, N, D) feats / (B, N) weights tensors are consumed UNPADDED: ragged
    # tiles rely on clamped block DMA + the in-kernel validity mask.
    if n_span != N:
        qn = jnp.pad(qn, ((0, n_span - N), (0, 0)))

    use_mxu = not _is_v5e()    # v5e: HBM-bound + no bf16 VALU -> keep VPU reductions

    q_spec = pl.BlockSpec((n_span, D), lambda b, n: (0, 0))     # VMEM-resident, fetched once
    f_spec = pl.BlockSpec((tb, tn, D), lambda b, n: (b, n, 0))
    out_spec = pl.BlockSpec((tb, 1), lambda b, n: (b, 0))       # resident across the N axis

    scratch = [pltpu.VMEM((tb, 1), jnp.float32)]                # num accumulator
    if weights is None:
        kernel = functools.partial(_fine_score_kernel_mean, tn=tn, n_true=N,
                                   inv_n=float(1.0 / N), use_mxu=use_mxu)
        in_specs = [q_spec, f_spec]
        args = (qn, feats)
    else:
        kernel = functools.partial(_fine_score_kernel_weighted, tn=tn, n_true=N,
                                   use_mxu=use_mxu)
        in_specs = [q_spec, f_spec, pl.BlockSpec((tb, tn), lambda b, n: (b, n))]
        scratch.append(pltpu.VMEM((tb, 1), jnp.float32))        # den accumulator
        args = (qn, feats, jnp.asarray(weights).astype(jnp.float32))

    # Scoped-VMEM estimate: double-buffered feats tile + resident q + bf16 product
    # temporaries (+ small MXU result tiles) or f32 upcast copies on v5e, plus slack;
    # clamped to the per-generation headroom under physical VMEM.
    feats_tile = tb * tn * D * itemsize
    est = (2 * feats_tile
           + 2 * n_span * D * qn.dtype.itemsize
           + (2 * tb * tn * 4 if weights is not None else 0))
    if use_mxu:
        est += 2 * feats_tile + 2 * tb * tn * 128 * 4
    else:
        est += 3 * tb * tn * D * 4
    vmem_bytes = int(min(max(est + (2 << 20), 16 << 20), scoped_cap))

    scores = pl.pallas_call(
        kernel,
        out_shape=jax.ShapeDtypeStruct((b_blocks * tb, 1), jnp.float32),
        grid_spec=pltpu.PrefetchScalarGridSpec(
            num_scalar_prefetch=0,
            grid=(b_blocks, n_blocks),
            in_specs=in_specs,
            out_specs=out_spec,
            scratch_shapes=scratch,
        ),
        compiler_params=pltpu.CompilerParams(
            dimension_semantics=("parallel", "arbitrary"),   # views parallel, patches reduced
            vmem_limit_bytes=vmem_bytes,
        ),
    )(*args)
    return scores[:B, 0]


# --------------------------------------------------------------------------- module
class DinoOnlinePoseEstimatorPallas:
    """Pallas/JAX re-implementation of DinoOnlinePoseEstimator.forward_fine scoring."""

    def __init__(self, n_fine_poses=64, feature_dim=128, patch_grid=(8, 8), seed=0):
        # TODO(synk): DINOv2FeatureExtractor (ViT backbone), MeshRenderer and the coarse
        # estimator (+disk cache) have no Pallas equivalent here; only the fine scoring
        # hot path runs as a TPU kernel.
        rng = np.random.default_rng(seed)
        self.fine_mesh_poses = self._generate_poses(n_fine_poses, rng)
        self.rendering_scale = 0.25
        self.feature_dim = feature_dim
        self.patch_grid = patch_grid  # module hardcodes (30, 30) for DINOv2@420px

    @staticmethod
    def _generate_poses(n, rng):
        # Deterministic random rotations via normalized quaternions; translation on +z.
        q = rng.standard_normal((n, 4))
        q /= np.linalg.norm(q, axis=1, keepdims=True)
        w, x, y, z = q[:, 0], q[:, 1], q[:, 2], q[:, 3]
        R = np.stack([
            1 - 2 * (y * y + z * z), 2 * (x * y - z * w), 2 * (x * z + y * w),
            2 * (x * y + z * w), 1 - 2 * (x * x + z * z), 2 * (y * z - x * w),
            2 * (x * z - y * w), 2 * (y * z + x * w), 1 - 2 * (x * x + y * y),
        ], axis=-1).reshape(n, 3, 3)
        T = np.tile(np.eye(4, dtype=np.float64), (n, 1, 1))
        T[:, :3, :3] = R
        T[:, 2, 3] = 1.0
        return T

    @staticmethod
    def geodesic_distance(render_poses, query_pose, degrees=True):
        # ||as_rotvec(R_i @ Rq^T)|| == rotation angle == arccos((trace - 1) / 2)
        render_rots = render_poses[:, :3, :3]
        query_rot = query_pose[:3, :3]
        diffs = render_rots @ query_rot.T
        tr = np.trace(diffs, axis1=1, axis2=2)
        dists = np.arccos(np.clip((tr - 1.0) / 2.0, -1.0, 1.0))
        if degrees:
            dists = np.rad2deg(dists)
        return dists

    def forward_fine(self, proposal, proposal_mask, feats_fine_template_all,
                     masks_fine_template_all, K, bbox, est_scale, prev_pose,
                     neighborhood=15, mask_scores=False, query_feat=None):
        # feats_fine_template_all stands in for feature_extractor(renderer(mesh, poses)).
        # TODO(synk): query_feat=None branch requires DINOv2 on `proposal`; pass raw
        # query features instead — normalization is applied here (idempotent if the
        # features are already normalized, matching both module branches).
        # TODO(synk): if the templates are reused across frames, pre-normalizing them
        # offline would drop the fused f*f/rsqrt work entirely.
        assert query_feat is not None

        dists = self.geodesic_distance(self.fine_mesh_poses[:, :3, :3], prev_pose)
        close_poses = np.where(dists < neighborhood)[0]
        selected_poses = self.fine_mesh_poses[close_poses]

        feats_sel = jnp.asarray(feats_fine_template_all)[close_poses]   # (B, N, D)
        B, N, _ = feats_sel.shape
        qf = jnp.asarray(query_feat)[0]                                  # (N, D)

        if mask_scores:
            # torch: logical_or(masks, proposal_mask[None]) -> F.interpolate(bilinear, 30x30)
            masks_sel = np.asarray(masks_fine_template_all)[close_poses]
            masks = jnp.logical_or(jnp.asarray(masks_sel),
                                   jnp.asarray(proposal_mask)[None]).astype(jnp.float32)
            ph, pw = self.patch_grid
            weights = jax.image.resize(masks, (B, ph, pw), method="bilinear")
            weights = weights.reshape(B, ph * pw).astype(jnp.float32)
        else:
            weights = None   # specialized kernel: no weights input, plain mean over N

        scores = pallas_view_scores(qf, feats_sel, weights)    # (B,) — Pallas hot path
        top_score = jnp.max(scores)                            # tiny glue over views
        top_index = jnp.argmax(scores)

        # TODO(synk): depthmap_to_pointcloud / get_z_from_pointcloud need rendered depth
        # maps from MeshRenderer; TCO translation refinement is not reproducible here.
        out_dict = {
            "scores": [top_score],
            "top_index": top_index,
            "selected_pose": selected_poses[int(top_index)],
            "proposal": proposal,
            "K": K,
            "bbox": bbox,
        }
        return out_dict


# --------------------------------------------------------------------------- demo
if __name__ == "__main__":
    key = jax.random.PRNGKey(0)
    n_fine = 64          # small stand-in for n_fine_poses=10000
    N, D = 64, 128       # small stand-in for 900 patches x 1024-dim DINOv2 features
    H = W = 32

    est = DinoOnlinePoseEstimatorPallas(n_fine_poses=n_fine, feature_dim=D,
                                        patch_grid=(8, 8), seed=0)

    k1, k2, k3, k4, k5, k6, k7, k8, k9 = jax.random.split(key, 9)
    proposal = jax.random.normal(k1, (3, H, W), jnp.bfloat16)            # NCHW image crop
    proposal_mask = jax.random.uniform(k2, (H, W)) > 0.5
    query_feat = jax.random.normal(k3, (1, N, D), jnp.bfloat16)          # (1, N, D)
    feats_templates = jax.random.normal(k4, (n_fine, N, D), jnp.bfloat16)
    masks_templates = np.asarray(jax.random.uniform(k5, (n_fine, H, W)) > 0.5)

    K = np.array([[120.0, 0.0, 16.0], [0.0, 120.0, 16.0], [0.0, 0.0, 1.0]], np.float32)
    bbox = np.array([4.0, 4.0, 28.0, 28.0], np.float32)
    prev_pose = est.fine_mesh_poses[0]   # guarantees at least one pose within neighborhood

    out_mean = est.forward_fine(proposal, proposal_mask, feats_templates, masks_templates,
                                K, bbox, est_scale=1.0, prev_pose=prev_pose,
                                neighborhood=60.0, mask_scores=False, query_feat=query_feat)
    out_mask = est.forward_fine(proposal, proposal_mask, feats_templates, masks_templates,
                                K, bbox, est_scale=1.0, prev_pose=prev_pose,
                                neighborhood=60.0, mask_scores=True, query_feat=query_feat)

    # Correctness spot-checks of the Pallas hot path against a pure-JAX reference.
    def _ref_scores(q, f, w=None):
        q = q.astype(jnp.float32)
        f = f.astype(jnp.float32)
        qn = q / jnp.maximum(jnp.linalg.norm(q, axis=-1, keepdims=True), _EPS_NORM)
        fn = f / jnp.maximum(jnp.linalg.norm(f, axis=-1, keepdims=True), _EPS_NORM)
        s = jnp.sum(fn * qn[None], axis=-1)
        if w is None:
            return s.mean(axis=-1)
        return (s * w).sum(-1) / w.sum(-1)

    qf = jnp.asarray(query_feat)[0]
    rand_w = jax.random.uniform(k6, (n_fine, N), jnp.float32) + 0.1
    got_mean = pallas_view_scores(qf, feats_templates, None)
    got_wtd = pallas_view_scores(qf, feats_templates, rand_w)
    np.testing.assert_allclose(np.asarray(got_mean),
                               np.asarray(_ref_scores(qf, feats_templates)),
                               rtol=2e-2, atol=2e-3)
    np.testing.assert_allclose(np.asarray(got_wtd),
                               np.asarray(_ref_scores(qf, feats_templates, rand_w)),
                               rtol=2e-2, atol=2e-3)

    # Ragged-shape check: B not a multiple of 8, N not covered by the tile grid,
    # forced multi-tile reduction over N — exercises the clamped-DMA + iota-mask path.
    B2, N2 = 13, 200
    q2 = jax.random.normal(k7, (N2, D), jnp.bfloat16)
    f2 = jax.random.normal(k8, (B2, N2, D), jnp.bfloat16)
    w2 = jax.random.uniform(k9, (B2, N2), jnp.float32) + 0.1
    got2_mean = pallas_view_scores(q2, f2, None, max_tile_bytes=300 * 1024)
    got2_wtd = pallas_view_scores(q2, f2, w2, max_tile_bytes=300 * 1024)
    np.testing.assert_allclose(np.asarray(got2_mean),
                               np.asarray(_ref_scores(q2, f2)),
                               rtol=2e-2, atol=2e-3)
    np.testing.assert_allclose(np.asarray(got2_wtd),
                               np.asarray(_ref_scores(q2, f2, w2)),
                               rtol=2e-2, atol=2e-3)

    jax.block_until_ready(out_mean["scores"][0])
    jax.block_until_ready(out_mask["scores"][0])
    print("KERNEL_OK")
</pallas_src>

<mosaic_0001>
module attributes {stable_mosaic.version = 11 : i64} {
  func.func @_fine_score_kernel_mean(%arg0: i32, %arg1: i32, %arg2: memref<64x128xbf16, #tpu.memory_space<vmem>>, %arg3: memref<3x64x128xbf16, #tpu.memory_space<vmem>>, %arg4: memref<3x1xf32, #tpu.memory_space<vmem>>, %arg5: memref<3x1xf32, #tpu.memory_space<vmem>>) attributes {dimension_semantics = [#tpu.dimension_semantics<parallel>, #tpu.dimension_semantics<arbitrary>], iteration_bounds = array<i64: 1, 1>, scalar_prefetch = 0 : i64, scratch_operands = 1 : i64, tpu.core_type = #tpu.core_type<tc>, window_params = [{pipeline_mode = #tpu.pipeline_mode<synchronous>, transform_indices = @transform_0, window_bounds = array<i64: 64, 128>}, {transform_indices = @transform_1, window_bounds = array<i64: 3, 64, 128>}, {transform_indices = @transform_2, window_bounds = array<i64: 3, 1>}]} {
    %c0_i32 = arith.constant 0 : i32
    %0 = arith.cmpi eq, %arg1, %c0_i32 : i32
    %1 = arith.extui %0 : i1 to i32
    %c0_i32_0 = arith.constant 0 : i32
    %2 = arith.cmpi ne, %1, %c0_i32_0 : i32
    scf.if %2 {
      %cst_19 = arith.constant 0.000000e+00 : f32
      %34 = vector.broadcast %cst_19 : f32 to vector<3x1xf32>
      %c0_20 = arith.constant 0 : index
      %c0_21 = arith.constant 0 : index
      %35 = vector.load %arg5[%c0_20, %c0_21] : memref<3x1xf32, #tpu.memory_space<vmem>>, vector<3x1xf32>
      tpu.vector_store %arg5[%c0_20, %c0_21], %34 {strides = array<i32>} : memref<3x1xf32, #tpu.memory_space<vmem>>, vector<3x1xf32>,
    } else {
    }
    %c0 = arith.constant 0 : index
    %c0_1 = arith.constant 0 : index
    %c0_2 = arith.constant 0 : index
    %3 = vector.load %arg3[%c0, %c0_1, %c0_2] : memref<3x64x128xbf16, #tpu.memory_space<vmem>>, vector<3x64x128xbf16>
    %c0_3 = arith.constant 0 : index
    %c0_4 = arith.constant 0 : index
    %4 = vector.load %arg2[%c0_3, %c0_4] : memref<64x128xbf16, #tpu.memory_space<vmem>>, vector<64x128xbf16>
    %5 = vector.shape_cast %4 : vector<64x128xbf16> to vector<1x64x128xbf16>
    %6 = vector.broadcast %5 : vector<1x64x128xbf16> to vector<3x64x128xbf16>
    %7 = arith.mulf %3, %6 : vector<3x64x128xbf16>
    %8 = arith.mulf %3, %3 : vector<3x64x128xbf16>
    %cst = arith.constant 1.000000e+00 : bf16
    %9 = vector.broadcast %cst : bf16 to vector<128x128xbf16>
    %10 = vector.shape_cast %7 : vector<3x64x128xbf16> to vector<192x128xbf16>
    %cst_5 = arith.constant dense<0.000000e+00> : vector<192x128xf32>
    %11 = tpu.matmul %10, %9, %cst_5 {dimension_numbers = #tpu.dot_dimension_numbers<[1], [0], [0], [1], [0, 0, 1, 1], [], []>} : vector<192x128xbf16>, vector<128x128xbf16>, vector<192x128xf32> -> vector<192x128xf32>
    %12 = vector.shape_cast %8 : vector<3x64x128xbf16> to vector<192x128xbf16>
    %cst_6 = arith.constant dense<0.000000e+00> : vector<192x128xf32>
    %13 = tpu.matmul %12, %9, %cst_6 {dimension_numbers = #tpu.dot_dimension_numbers<[1], [0], [0], [1], [0, 0, 1, 1], [], []>} : vector<192x128xbf16>, vector<128x128xbf16>, vector<192x128xf32> -> vector<192x128xf32>
    %14 = vector.shape_cast %11 : vector<192x128xf32> to vector<3x64x128xf32>
    %cst_7 = arith.constant dense<0.000000e+00> : vector<3x64xf32>
    %15 = vector.multi_reduction <add>, %14, %cst_7 [2] : vector<3x64x128xf32> to vector<3x64xf32>
    %cst_8 = arith.constant 7.812500e-03 : f32
    %16 = vector.broadcast %cst_8 : f32 to vector<3x64xf32>
    %17 = arith.mulf %15, %16 : vector<3x64xf32>
    %18 = vector.shape_cast %13 : vector<192x128xf32> to vector<3x64x128xf32>
    %cst_9 = arith.constant dense<0.000000e+00> : vector<3x64xf32>
    %19 = vector.multi_reduction <add>, %18, %cst_9 [2] : vector<3x64x128xf32> to vector<3x64xf32>
    %cst_10 = arith.constant 7.812500e-03 : f32
    %20 = vector.broadcast %cst_10 : f32 to vector<3x64xf32>
    %21 = arith.mulf %19, %20 : vector<3x64xf32>
    %cst_11 = arith.constant 1.000000e-24 : f32
    %22 = vector.broadcast %cst_11 : f32 to vector<3x64xf32>
    %23 = arith.maximumf %21, %22 : vector<3x64xf32>
    %24 = math.rsqrt %23 : vector<3x64xf32>
    %25 = arith.mulf %17, %24 : vector<3x64xf32>
    %c0_12 = arith.constant 0 : index
    %c0_13 = arith.constant 0 : index
    %26 = vector.load %arg5[%c0_12, %c0_13] : memref<3x1xf32, #tpu.memory_space<vmem>>, vector<3x1xf32>
    %cst_14 = arith.constant dense<0.000000e+00> : vector<3xf32>
    %27 = vector.multi_reduction <add>, %25, %cst_14 [1] : vector<3x64xf32> to vector<3xf32>
    %28 = vector.shape_cast %27 : vector<3xf32> to vector<3x1xf32>
    %29 = arith.addf %26, %28 : vector<3x1xf32>
    %c0_15 = arith.constant 0 : index
    %c0_16 = arith.constant 0 : index
    %30 = vector.load %arg5[%c0_15, %c0_16] : memref<3x1xf32, #tpu.memory_space<vmem>>, vector<3x1xf32>
    tpu.vector_store %arg5[%c0_15, %c0_16], %29 {strides = array<i32>} : memref<3x1xf32, #tpu.memory_space<vmem>>, vector<3x1xf32>,
    %c0_i32_17 = arith.constant 0 : i32
    %31 = arith.cmpi eq, %arg1, %c0_i32_17 : i32
    %32 = arith.extui %31 : i1 to i32
    %c0_i32_18 = arith.constant 0 : i32
    %33 = arith.cmpi ne, %32, %c0_i32_18 : i32
    scf.if %33 {
      %c0_19 = arith.constant 0 : index
      %c0_20 = arith.constant 0 : index
      %34 = vector.load %arg5[%c0_19, %c0_20] : memref<3x1xf32, #tpu.memory_space<vmem>>, vector<3x1xf32>
      %cst_21 = arith.constant 1.562500e-02 : f32
      %35 = vector.broadcast %cst_21 : f32 to vector<3x1xf32>
      %36 = arith.mulf %34, %35 : vector<3x1xf32>
      %c0_22 = arith.constant 0 : index
      %c0_23 = arith.constant 0 : index
      %37 = vector.load %arg4[%c0_22, %c0_23] : memref<3x1xf32, #tpu.memory_space<vmem>>, vector<3x1xf32>
      tpu.vector_store %arg4[%c0_22, %c0_23], %36 {strides = array<i32>} : memref<3x1xf32, #tpu.memory_space<vmem>>, vector<3x1xf32>,
    } else {
    }
    return
  }
  func.func @transform_0(%arg0: i32, %arg1: i32) -> (i32, i32) {
    %c0_i32 = arith.constant 0 : i32
    %c0_i32_0 = arith.constant 0 : i32
    %c0_i32_1 = arith.constant 0 : i32
    return %c0_i32, %c0_i32_0 : i32, i32
  }
  func.func @transform_1(%arg0: i32, %arg1: i32) -> (i32, i32, i32) {
    %c0_i32 = arith.constant 0 : i32
    %c0_i32_0 = arith.constant 0 : i32
    return %arg0, %arg1, %c0_i32 : i32, i32, i32
  }
  func.func @transform_2(%arg0: i32, %arg1: i32) -> (i32, i32) {
    %c0_i32 = arith.constant 0 : i32
    %c0_i32_0 = arith.constant 0 : i32
    return %arg0, %c0_i32 : i32, i32
  }
}

</mosaic_0001>

<llo_original>
// kernel: tpu_custom_call.1
$region0: #{tpu_custom_call.1}
  #allocation0 [shape = 'u32[]', space=smem, size = 0x4, offset = 0x4, fixed_abs, tag = 'smem constant byte address 0x4 - core index']
  #allocation1 [shape = 'u32[144,128]{1,0:T(1,128)}', space=vmem, size = 0x12000, scoped, tag = 'internal scratch']
  #allocation2 [shape = 'f32[3,1]{1,0:T(4,128)}', space=vmem, size = 0x800, scoped, tag = 'scratch operand']
  %s0 = inlined_call_operand.hbm [shape: bf16[64,128], index: 0, kind: input, shape index: {}]
  %s1 = inlined_call_operand.hbm [shape: bf16[3,64,128], index: 1, kind: input, shape index: {}]
  %s2 = inlined_call_operand.vmem [shape: f32[3,1], index: 2, kind: output, shape index: {}]
  %s3 = sld [smem:[#allocation0]]
  $region34: #{tpu_custom_call.1} parent=0
    _
  %s5 = ssub.s32 1, %s3
  %s6 = scalar_select 0, %s5, %s3
  $region1: #{tpu_custom_call.1} parent=0
    #allocation3 [shape = 'u8[16384]{0}', space=vmem, size = 0x4000, scoped, tag = 'input window, operand 0, single buffered']
    #allocation4 [shape = 's32[1]{0}', space=sflag, size = 0x4, scoped, tag = 'scoped memory for tpu_custom_call.1']
    #allocation5 [shape = 'u8[49152]{0}', space=vmem, size = 0xc000, scoped, tag = 'input window, operand 1, single buffered']
    #allocation6 [shape = 's32[1]{0}', space=sflag, size = 0x4, scoped, tag = 'scoped memory for tpu_custom_call.1']
    %7 = vsyncpa [#allocation4], 0
    %8 = vsyncpa [#allocation6], 0
    // Predicated region
    $region2: #{tpu_custom_call.1} parent=1 // pred_check
      _
    $region3: #{tpu_custom_call.1} parent=1 // pred_check_branch
      %10 = sbr.rel (0) target = $region5
    $region4: #{tpu_custom_call.1} parent=1 // pred_region
      %s12 = ssub.s32 512, 512
      %13 = vsyncadd [#allocation4], %s12
      %s14 = sshll.u32 [#allocation3], 4
      %s15 = int_to_ptr.vmem [resolvable:$true] %s14
      %20 = dma.hbm_to_vmem [thread:$0]  %s0, 512, %s15, [#allocation4], 64, 64, 4
    $region5: #{tpu_custom_call.1} parent=1 // pred_fallthru
      _
    // Predicated region
    $region6: #{tpu_custom_call.1} parent=1 // pred_check
      _
    $region7: #{tpu_custom_call.1} parent=1 // pred_check_branch
      %22 = sbr.rel (0) target = $region9
    $region8: #{tpu_custom_call.1} parent=1 // pred_region
      %s24 = ssub.s32 1536, 1536
      %25 = vsyncadd [#allocation6], %s24
      %s26 = sshll.u32 [#allocation5], 4
      %s27 = int_to_ptr.vmem [resolvable:$true] %s26
      %32 = dma.hbm_to_vmem [thread:$0]  %s1, 1536, %s27, [#allocation6], 64, 64, 4
    $region9: #{tpu_custom_call.1} parent=1 // pred_fallthru
      _
    // Predicated region
    $region10: #{tpu_custom_call.1} parent=1 // pred_check
      _
    $region11: #{tpu_custom_call.1} parent=1 // pred_check_branch
      %34 = sbr.rel (0) target = $region13
    $region12: #{tpu_custom_call.1} parent=1 // pred_region
      %35 = dma.done [#allocation4], 512
    $region13: #{tpu_custom_call.1} parent=1 // pred_fallthru
      _
    // Predicated region
    $region14: #{tpu_custom_call.1} parent=1 // pred_check
      _
    $region15: #{tpu_custom_call.1} parent=1 // pred_check_branch
      %37 = sbr.rel (0) target = $region17
    $region16: #{tpu_custom_call.1} parent=1 // pred_region
      %38 = dma.done [#allocation6], 1536
    $region17: #{tpu_custom_call.1} parent=1 // pred_fallthru
      _
    %p41 = scmp.eq.s32.totalorder 0, 0
    // Predicated region
    $region18: #{tpu_custom_call.1} parent=1 // pred_check
      %p42 = pneg %p41
    $region19: #{tpu_custom_call.1} parent=1 // pred_check_branch
      %44 = sbr.rel (%p42) target = $region21
    $region20: #{tpu_custom_call.1} parent=1 // pred_region
      %vm45 = vcmask 2048
      %46 = vst.msk [vmem:[#allocation2] sm:$0x7] %vm45, 0.0
    $region21: #{tpu_custom_call.1} parent=1 // pred_fallthru
      _
    %v47 = vld [vmem:[#allocation5] sm:$0xf]
    %v48 = vld [vmem:[#allocation5 + $0x4] sm:$0xf]
    %v49 = vld [vmem:[#allocation5 + $0x8] sm:$0xf]
    %v50 = vld [vmem:[#allocation5 + $0xc] sm:$0xf]
    %v51 = vld [vmem:[#allocation5 + $0x10] sm:$0xf]
    %v52 = vld [vmem:[#allocation5 + $0x14] sm:$0xf]
    %v53 = vld [vmem:[#allocation5 + $0x18] sm:$0xf]
    %v54 = vld [vmem:[#allocation5 + $0x1c] sm:$0xf]
    %v55 = vld [vmem:[#allocation5 + $0x20] sm:$0xf]
    %v56 = vld [vmem:[#allocation5 + $0x24] sm:$0xf]
    %v57 = vld [vmem:[#allocation5 + $0x28] sm:$0xf]
    %v58 = vld [vmem:[#allocation5 + $0x2c] sm:$0xf]
    %v59 = vld [vmem:[#allocation5 + $0x30] sm:$0xf]
    %v60 = vld [vmem:[#allocation5 + $0x34] sm:$0xf]
    %v61 = vld [vmem:[#allocation5 + $0x38] sm:$0xf]
    %v62 = vld [vmem:[#allocation5 + $0x3c] sm:$0xf]
    %v63 = vld [vmem:[#allocation5 + $0x40] sm:$0xf]
    %v64 = vld [vmem:[#allocation5 + $0x44] sm:$0xf]
    %v65 = vld [vmem:[#allocation5 + $0x48] sm:$0xf]
    %v66 = vld [vmem:[#allocation5 + $0x4c] sm:$0xf]
    %v67 = vld [vmem:[#allocation5 + $0x50] sm:$0xf]
    %v68 = vld [vmem:[#allocation5 + $0x54] sm:$0xf]
    %v69 = vld [vmem:[#allocation5 + $0x58] sm:$0xf]
    %v70 = vld [vmem:[#allocation5 + $0x5c] sm:$0xf]
    %v71 = vld [vmem:[#allocation3] sm:$0xf]
    %v72 = vld [vmem:[#allocation3 + $0x4] sm:$0xf]
    %v73 = vld [vmem:[#allocation3 + $0x8] sm:$0xf]
    %v74 = vld [vmem:[#allocation3 + $0xc] sm:$0xf]
    %v75 = vld [vmem:[#allocation3 + $0x10] sm:$0xf]
    %v76 = vld [vmem:[#allocation3 + $0x14] sm:$0xf]
    %v77 = vld [vmem:[#allocation3 + $0x18] sm:$0xf]
    %v78 = vld [vmem:[#allocation3 + $0x1c] sm:$0xf]
    %v79 = vmul.bf16 %v47, %v71
    %v80 = vmul.bf16 %v48, %v72
    %v81 = vmul.bf16 %v49, %v73
    %v82 = vmul.bf16 %v50, %v74
    %v83 = vmul.bf16 %v51, %v75
    %v84 = vmul.bf16 %v52, %v76
    %v85 = vmul.bf16 %v53, %v77
    %v86 = vmul.bf16 %v54, %v78
    %v87 = vmul.bf16 %v55, %v71
    %v88 = vmul.bf16 %v56, %v72
    %v89 = vmul.bf16 %v57, %v73
    %v90 = vmul.bf16 %v58, %v74
    %v91 = vmul.bf16 %v59, %v75
    %v92 = vmul.bf16 %v60, %v76
    %v93 = vmul.bf16 %v61, %v77
    %v94 = vmul.bf16 %v62, %v78
    %v95 = vmul.bf16 %v63, %v71
    %v96 = vmul.bf16 %v64, %v72
    %v97 = vmul.bf16 %v65, %v73
    %v98 = vmul.bf16 %v66, %v74
    %v99 = vmul.bf16 %v67, %v75
    %v100 = vmul.bf16 %v68, %v76
    %v101 = vmul.bf16 %v69, %v77
    %v102 = vmul.bf16 %v70, %v78
    %v103 = vmul.bf16 %v47, %v47
    %v104 = vmul.bf16 %v48, %v48
    %v105 = vmul.bf16 %v49, %v49
    %v106 = vmul.bf16 %v50, %v50
    %v107 = vmul.bf16 %v51, %v51
    %v108 = vmul.bf16 %v52, %v52
    %v109 = vmul.bf16 %v53, %v53
    %v110 = vmul.bf16 %v54, %v54
    %v111 = vmul.bf16 %v55, %v55
    %v112 = vmul.bf16 %v56, %v56
    %v113 = vmul.bf16 %v57, %v57
    %v114 = vmul.bf16 %v58, %v58
    %v115 = vmul.bf16 %v59, %v59
    %v116 = vmul.bf16 %v60, %v60
    %v117 = vmul.bf16 %v61, %v61
    %v118 = vmul.bf16 %v62, %v62
    %v119 = vmul.bf16 %v63, %v63
    %v120 = vmul.bf16 %v64, %v64
    %v121 = vmul.bf16 %v65, %v65
    %v122 = vmul.bf16 %v66, %v66
    %v123 = vmul.bf16 %v67, %v67
    %v124 = vmul.bf16 %v68, %v68
    %v125 = vmul.bf16 %v69, %v69
    %v126 = vmul.bf16 %v70, %v70
    %v151 = vunpack.c.l.b16 %v79
    %v152 = vunpack.c.l.b16 %v80
    %v153 = vunpack.c.l.b16 %v81
    %v154 = vunpack.c.l.b16 %v82
    %v155 = vunpack.c.l.b16 %v83
    %v156 = vunpack.c.l.b16 %v84
    %v157 = vunpack.c.l.b16 %v85
    %v158 = vunpack.c.l.b16 %v86
    %v159 = vunpack.c.l.b16 %v87
    %v160 = vunpack.c.l.b16 %v88
    %v161 = vunpack.c.l.b16 %v89
    %v162 = vunpack.c.l.b16 %v90
    %v163 = vunpack.c.l.b16 %v91
    %v164 = vunpack.c.l.b16 %v92
    %v165 = vunpack.c.l.b16 %v93
    %v166 = vunpack.c.l.b16 %v94
    %v167 = vunpack.c.l.b16 %v95
    %v168 = vunpack.c.l.b16 %v96
    %v169 = vunpack.c.l.b16 %v97
    %v170 = vunpack.c.l.b16 %v98
    %v171 = vunpack.c.l.b16 %v99
    %v172 = vunpack.c.l.b16 %v100
    %v173 = vunpack.c.l.b16 %v101
    %v174 = vunpack.c.l.b16 %v102
    %v175 = vpack.c.b16 %v152, %v151
    %v176 = vpack.c.b16 %v154, %v153
    %v177 = vpack.c.b16 %v156, %v155
    %v178 = vpack.c.b16 %v158, %v157
    %v179 = vpack.c.b16 %v160, %v159
    %v180 = vpack.c.b16 %v162, %v161
    %v181 = vpack.c.b16 %v164, %v163
    %v182 = vpack.c.b16 %v166, %v165
    %v183 = vpack.c.b16 %v168, %v167
    %v184 = vpack.c.b16 %v170, %v169
    %v185 = vpack.c.b16 %v172, %v171
    %v186 = vpack.c.b16 %v174, %v173
    %199 = vmatprep.subr.bf16.mxu0 0
    %200 = vmatpush1.bf16.msra.mxu0 1065369472
    %201 = vmatprep.subr.bf16.mxu0 0
    %202 = vmatpush1.bf16.msra.mxu0 1065369472
    %203 = vmatprep.subr.bf16.mxu0 0
    %204 = vmatpush1.bf16.msra.mxu0 1065369472
    %205 = vmatprep.subr.bf16.mxu0 0
    %206 = vmatpush1.bf16.msra.mxu0 1065369472
    %207 = vmatprep.subr.bf16.mxu0 0
    %208 = vmatpush1.bf16.msra.mxu0 1065369472
    %209 = vmatprep.subr.bf16.mxu0 0
    %210 = vmatpush1.bf16.msra.mxu0 1065369472
    %211 = vmatprep.subr.bf16.mxu0 0
    %212 = vmatpush1.bf16.msra.mxu0 1065369472
    %213 = vmatprep.subr.bf16.mxu0 0
    %214 = vmatpush1.bf16.msra.mxu0 1065369472
    %215 = vmatprep.subr.bf16.mxu0 0
    %216 = vmatpush1.bf16.msra.mxu0 0
    %217 = vmatprep.subr.bf16.mxu0 0
    %218 = vmatpush1.bf16.msra.mxu0 0
    %219 = vmatprep.subr.bf16.mxu0 0
    %220 = vmatpush1.bf16.msra.mxu0 0
    %221 = vmatprep.subr.bf16.mxu0 0
    %222 = vmatpush1.bf16.msra.mxu0 0
    %223 = vmatprep.subr.bf16.mxu0 0
    %224 = vmatpush1.bf16.msra.mxu0 0
    %225 = vmatprep.subr.bf16.mxu0 0
    %226 = vmatpush1.bf16.msra.mxu0 0
    %227 = vmatprep.subr.bf16.mxu0 0
    %228 = vmatpush1.bf16.msra.mxu0 0
    %229 = vmatprep.subr.bf16.mxu0 0
    %230 = vmatpush1.bf16.msra.mxu0 0
    %231 = vmatprep.mubr.bf16.mxu0 0
    %232 = vmatmul.mubr.bf16.gmra.mrb[0].mxu0 %v175
    %v233 = vpop.f32.mrb[0].mxu0
    %v234 = vadd.f32 0.0, %v233
    %v235 = vpop.f32.mrb[0].mxu0
    %v236 = vpop.f32.mrb[0].mxu0
    %v237 = vadd.f32 0.0, %v236
    %v238 = vpop.f32.mrb[0].mxu0
    %239 = vmatprep.mubr.bf16.mxu0 0
    %240 = vmatmul.mubr.bf16.gmra.mrb[0].mxu0 %v176
    %v241 = vpop.f32.mrb[0].mxu0
    %v242 = vadd.f32 0.0, %v241
    %v243 = vpop.f32.mrb[0].mxu0
    %v244 = vpop.f32.mrb[0].mxu0
    %v245 = vadd.f32 0.0, %v244
    %v246 = vpop.f32.mrb[0].mxu0
    %247 = vmatprep.mubr.bf16.mxu0 0
    %248 = vmatmul.mubr.bf16.gmra.mrb[0].mxu0 %v177
    %v249 = vpop.f32.mrb[0].mxu0
    %v250 = vadd.f32 0.0, %v249
    %v251 = vpop.f32.mrb[0].mxu0
    %v252 = vpop.f32.mrb[0].mxu0
    %v253 = vadd.f32 0.0, %v252
    %v254 = vpop.f32.mrb[0].mxu0
    %255 = vmatprep.mubr.bf16.mxu0 0
    %256 = vmatmul.mubr.bf16.gmra.mrb[0].mxu0 %v178
    %v257 = vpop.f32.mrb[0].mxu0
    %v258 = vadd.f32 0.0, %v257
    %v259 = vpop.f32.mrb[0].mxu0
    %v260 = vpop.f32.mrb[0].mxu0
    %v261 = vadd.f32 0.0, %v260
    %v262 = vpop.f32.mrb[0].mxu0
    %263 = vmatprep.mubr.bf16.mxu0 0
    %264 = vmatmul.mubr.bf16.gmra.mrb[0].mxu0 %v179
    %v265 = vpop.f32.mrb[0].mxu0
    %v266 = vadd.f32 0.0, %v265
    %v267 = vpop.f32.mrb[0].mxu0
    %v268 = vpop.f32.mrb[0].mxu0
    %v269 = vadd.f32 0.0, %v268
    %v270 = vpop.f32.mrb[0].mxu0
    %271 = vmatprep.mubr.bf16.mxu0 0
    %272 = vmatmul.mubr.bf16.gmra.mrb[0].mxu0 %v180
    %v273 = vpop.f32.mrb[0].mxu0
    %v274 = vadd.f32 0.0, %v273
    %v275 = vpop.f32.mrb[0].mxu0
    %v276 = vpop.f32.mrb[0].mxu0
    %v277 = vadd.f32 0.0, %v276
    %v278 = vpop.f32.mrb[0].mxu0
    %279 = vmatprep.mubr.bf16.mxu0 0
    %280 = vmatmul.mubr.bf16.gmra.mrb[0].mxu0 %v181
    %v281 = vpop.f32.mrb[0].mxu0
    %v282 = vadd.f32 0.0, %v281
    %v283 = vpop.f32.mrb[0].mxu0
    %v284 = vpop.f32.mrb[0].mxu0
    %v285 = vadd.f32 0.0, %v284
    %v286 = vpop.f32.mrb[0].mxu0
    %287 = vmatprep.mubr.bf16.mxu0 0
    %288 = vmatmul.mubr.bf16.gmra.mrb[0].mxu0 %v182
    %v289 = vpop.f32.mrb[0].mxu0
    %v290 = vadd.f32 0.0, %v289
    %v291 = vpop.f32.mrb[0].mxu0
    %v292 = vpop.f32.mrb[0].mxu0
    %v293 = vadd.f32 0.0, %v292
    %v294 = vpop.f32.mrb[0].mxu0
    %295 = vmatprep.mubr.bf16.mxu0 0
    %296 = vmatmul.mubr.bf16.gmra.mrb[0].mxu0 %v183
    %v297 = vpop.f32.mrb[0].mxu0
    %v298 = vadd.f32 0.0, %v297
    %v299 = vpop.f32.mrb[0].mxu0
    %v300 = vpop.f32.mrb[0].mxu0
    %v301 = vadd.f32 0.0, %v300
    %v302 = vpop.f32.mrb[0].mxu0
    %303 = vmatprep.mubr.bf16.mxu0 0
    %304 = vmatmul.mubr.bf16.gmra.mrb[0].mxu0 %v184
    %v305 = vpop.f32.mrb[0].mxu0
    %v306 = vadd.f32 0.0, %v305
    %v307 = vpop.f32.mrb[0].mxu0
    %v308 = vpop.f32.mrb[0].mxu0
    %v309 = vadd.f32 0.0, %v308
    %v310 = vpop.f32.mrb[0].mxu0
    %311 = vmatprep.mubr.bf16.mxu0 0
    %312 = vmatmul.mubr.bf16.gmra.mrb[0].mxu0 %v185
    %v313 = vpop.f32.mrb[0].mxu0
    %v314 = vadd.f32 0.0, %v313
    %v315 = vpop.f32.mrb[0].mxu0
    %v316 = vpop.f32.mrb[0].mxu0
    %v317 = vadd.f32 0.0, %v316
    %v318 = vpop.f32.mrb[0].mxu0
    %319 = vmatprep.mubr.bf16.mxu0 0
    %320 = vmatmul.mubr.bf16.gmra.mrb[0].mxu0 %v186
    %v321 = vpop.f32.mrb[0].mxu0
    %v322 = vadd.f32 0.0, %v321
    %v323 = vpop.f32.mrb[0].mxu0
    %v324 = vpop.f32.mrb[0].mxu0
    %v325 = vadd.f32 0.0, %v324
    %v326 = vpop.f32.mrb[0].mxu0
    %327 = vdwg.mxu0
    %v352 = vunpack.c.l.b16 %v103
    %v353 = vunpack.c.l.b16 %v104
    %v354 = vunpack.c.l.b16 %v105
    %v355 = vunpack.c.l.b16 %v106
    %v356 = vunpack.c.l.b16 %v107
    %v357 = vunpack.c.l.b16 %v108
    %v358 = vunpack.c.l.b16 %v109
    %v359 = vunpack.c.l.b16 %v110
    %v360 = vunpack.c.l.b16 %v111
    %v361 = vunpack.c.l.b16 %v112
    %v362 = vunpack.c.l.b16 %v113
    %v363 = vunpack.c.l.b16 %v114
    %v364 = vunpack.c.l.b16 %v115
    %v365 = vunpack.c.l.b16 %v116
    %v366 = vunpack.c.l.b16 %v117
    %v367 = vunpack.c.l.b16 %v118
    %v368 = vunpack.c.l.b16 %v119
    %v369 = vunpack.c.l.b16 %v120
    %v370 = vunpack.c.l.b16 %v121
    %v371 = vunpack.c.l.b16 %v122
    %v372 = vunpack.c.l.b16 %v123
    %v373 = vunpack.c.l.b16 %v124
    %v374 = vunpack.c.l.b16 %v125
    %v375 = vunpack.c.l.b16 %v126
    %v376 = vpack.c.b16 %v353, %v352
    %v377 = vpack.c.b16 %v355, %v354
    %v378 = vpack.c.b16 %v357, %v356
    %v379 = vpack.c.b16 %v359, %v358
    %v380 = vpack.c.b16 %v361, %v360
    %v381 = vpack.c.b16 %v363, %v362
    %v382 = vpack.c.b16 %v365, %v364
    %v383 = vpack.c.b16 %v367, %v366
    %v384 = vpack.c.b16 %v369, %v368
    %v385 = vpack.c.b16 %v371, %v370
    %v386 = vpack.c.b16 %v373, %v372
    %v387 = vpack.c.b16 %v375, %v374
    %400 = vmatprep.subr.bf16.mxu0 0
    %401 = vmatpush1.bf16.msra.mxu0 1065369472
    %402 = vmatprep.subr.bf16.mxu0 0
    %403 = vmatpush1.bf16.msra.mxu0 1065369472
    %404 = vmatprep.subr.bf16.mxu0 0
    %405 = vmatpush1.bf16.msra.mxu0 1065369472
    %406 = vmatprep.subr.bf16.mxu0 0
    %407 = vmatpush1.bf16.msra.mxu0 1065369472
    %408 = vmatprep.subr.bf16.mxu0 0
    %409 = vmatpush1.bf16.msra.mxu0 1065369472
    %410 = vmatprep.subr.bf16.mxu0 0
    %411 = vmatpush1.bf16.msra.mxu0 1065369472
    %412 = vmatprep.subr.bf16.mxu0 0
    %413 = vmatpush1.bf16.msra.mxu0 1065369472
    %414 = vmatprep.subr.bf16.mxu0 0
    %415 = vmatpush1.bf16.msra.mxu0 1065369472
    %416 = vmatprep.subr.bf16.mxu0 0
    %417 = vmatpush1.bf16.msra.mxu0 0
    %418 = vmatprep.subr.bf16.mxu0 0
    %419 = vmatpush1.bf16.msra.mxu0 0
    %420 = vmatprep.subr.bf16.mxu0 0
    %421 = vmatpush1.bf16.msra.mxu0 0
    %422 = vmatprep.subr.bf16.mxu0 0
    %423 = vmatpush1.bf16.msra.mxu0 0
    %424 = vmatprep.subr.bf16.mxu0 0
    %425 = vmatpush1.bf16.msra.mxu0 0
    %426 = vmatprep.subr.bf16.mxu0 0
    %427 = vmatpush1.bf16.msra.mxu0 0
    %428 = vmatprep.subr.bf16.mxu0 0
    %429 = vmatpush1.bf16.msra.mxu0 0
    %430 = vmatprep.subr.bf16.mxu0 0
    %431 = vmatpush1.bf16.msra.mxu0 0
    %432 = vmatprep.mubr.bf16.mxu0 0
    %433 = vmatmul.mubr.bf16.gmra.mrb[0].mxu0 %v376
    %v434 = vpop.f32.mrb[0].mxu0
    %v435 = vadd.f32 0.0, %v434
    %v436 = vpop.f32.mrb[0].mxu0
    %v437 = vpop.f32.mrb[0].mxu0
    %v438 = vadd.f32 0.0, %v437
    %v439 = vpop.f32.mrb[0].mxu0
    %440 = vmatprep.mubr.bf16.mxu0 0
    %441 = vmatmul.mubr.bf16.gmra.mrb[0].mxu0 %v377
    %v442 = vpop.f32.mrb[0].mxu0
    %v443 = vadd.f32 0.0, %v442
    %v444 = vpop.f32.mrb[0].mxu0
    %v445 = vpop.f32.mrb[0].mxu0
    %v446 = vadd.f32 0.0, %v445
    %v447 = vpop.f32.mrb[0].mxu0
    %448 = vmatprep.mubr.bf16.mxu0 0
    %449 = vmatmul.mubr.bf16.gmra.mrb[0].mxu0 %v378
    %v450 = vpop.f32.mrb[0].mxu0
    %v451 = vadd.f32 0.0, %v450
    %v452 = vpop.f32.mrb[0].mxu0
    %v453 = vpop.f32.mrb[0].mxu0
    %v454 = vadd.f32 0.0, %v453
    %v455 = vpop.f32.mrb[0].mxu0
    %456 = vmatprep.mubr.bf16.mxu0 0
    %457 = vmatmul.mubr.bf16.gmra.mrb[0].mxu0 %v379
    %v458 = vpop.f32.mrb[0].mxu0
    %v459 = vadd.f32 0.0, %v458
    %v460 = vpop.f32.mrb[0].mxu0
    %v461 = vpop.f32.mrb[0].mxu0
    %v462 = vadd.f32 0.0, %v461
    %v463 = vpop.f32.mrb[0].mxu0
    %464 = vmatprep.mubr.bf16.mxu0 0
    %465 = vmatmul.mubr.bf16.gmra.mrb[0].mxu0 %v380
    %v466 = vpop.f32.mrb[0].mxu0
    %v467 = vadd.f32 0.0, %v466
    %v468 = vpop.f32.mrb[0].mxu0
    %v469 = vpop.f32.mrb[0].mxu0
    %v470 = vadd.f32 0.0, %v469
    %v471 = vpop.f32.mrb[0].mxu0
    %472 = vmatprep.mubr.bf16.mxu0 0
    %473 = vmatmul.mubr.bf16.gmra.mrb[0].mxu0 %v381
    %v474 = vpop.f32.mrb[0].mxu0
    %v475 = vadd.f32 0.0, %v474
    %v476 = vpop.f32.mrb[0].mxu0
    %v477 = vpop.f32.mrb[0].mxu0
    %v478 = vadd.f32 0.0, %v477
    %v479 = vpop.f32.mrb[0].mxu0
    %480 = vmatprep.mubr.bf16.mxu0 0
    %481 = vmatmul.mubr.bf16.gmra.mrb[0].mxu0 %v382
    %v482 = vpop.f32.mrb[0].mxu0
    %v483 = vadd.f32 0.0, %v482
    %v484 = vpop.f32.mrb[0].mxu0
    %v485 = vpop.f32.mrb[0].mxu0
    %v486 = vadd.f32 0.0, %v485
    %v487 = vpop.f32.mrb[0].mxu0
    %488 = vmatprep.mubr.bf16.mxu0 0
    %489 = vmatmul.mubr.bf16.gmra.mrb[0].mxu0 %v383
    %v490 = vpop.f32.mrb[0].mxu0
    %v491 = vadd.f32 0.0, %v490
    %v492 = vpop.f32.mrb[0].mxu0
    %v493 = vpop.f32.mrb[0].mxu0
    %v494 = vadd.f32 0.0, %v493
    %v495 = vpop.f32.mrb[0].mxu0
    %496 = vmatprep.mubr.bf16.mxu0 0
    %497 = vmatmul.mubr.bf16.gmra.mrb[0].mxu0 %v384
    %v498 = vpop.f32.mrb[0].mxu0
    %v499 = vadd.f32 0.0, %v498
    %v500 = vpop.f32.mrb[0].mxu0
    %v501 = vpop.f32.mrb[0].mxu0
    %v502 = vadd.f32 0.0, %v501
    %v503 = vpop.f32.mrb[0].mxu0
    %504 = vmatprep.mubr.bf16.mxu0 0
    %505 = vmatmul.mubr.bf16.gmra.mrb[0].mxu0 %v385
    %v506 = vpop.f32.mrb[0].mxu0
    %v507 = vadd.f32 0.0, %v506
    %v508 = vpop.f32.mrb[0].mxu0
    %v509 = vpop.f32.mrb[0].mxu0
    %v510 = vadd.f32 0.0, %v509
    %v511 = vpop.f32.mrb[0].mxu0
    %512 = vmatprep.mubr.bf16.mxu0 0
    %513 = vmatmul.mubr.bf16.gmra.mrb[0].mxu0 %v386
    %v514 = vpop.f32.mrb[0].mxu0
    %v515 = vadd.f32 0.0, %v514
    %v516 = vpop.f32.mrb[0].mxu0
    %v517 = vpop.f32.mrb[0].mxu0
    %v518 = vadd.f32 0.0, %v517
    %v519 = vpop.f32.mrb[0].mxu0
    %520 = vmatprep.mubr.bf16.mxu0 0
    %521 = vmatmul.mubr.bf16.gmra.mrb[0].mxu0 %v387
    %v522 = vpop.f32.mrb[0].mxu0
    %v523 = vadd.f32 0.0, %v522
    %v524 = vpop.f32.mrb[0].mxu0
    %v525 = vpop.f32.mrb[0].mxu0
    %v526 = vadd.f32 0.0, %v525
    %v527 = vpop.f32.mrb[0].mxu0
    %528 = vdwg.mxu0
    %529 = vadd.xlane.f32.xlu0 %v234
    %v530 = vpop.xlane.xlu0 %529
    %531 = vadd.xlane.f32.xlu0 %v237
    %v532 = vpop.xlane.xlu0 %531
    %533 = vadd.xlane.f32.xlu0 %v242
    %v534 = vpop.xlane.xlu0 %533
    %535 = vadd.xlane.f32.xlu0 %v245
    %v536 = vpop.xlane.xlu0 %535
    %537 = vadd.xlane.f32.xlu0 %v250
    %v538 = vpop.xlane.xlu0 %537
    %539 = vadd.xlane.f32.xlu0 %v253
    %v540 = vpop.xlane.xlu0 %539
    %541 = vadd.xlane.f32.xlu0 %v258
    %v542 = vpop.xlane.xlu0 %541
    %543 = vadd.xlane.f32.xlu0 %v261
    %v544 = vpop.xlane.xlu0 %543
    %545 = vadd.xlane.f32.xlu0 %v266
    %v546 = vpop.xlane.xlu0 %545
    %547 = vadd.xlane.f32.xlu0 %v269
    %v548 = vpop.xlane.xlu0 %547
    %549 = vadd.xlane.f32.xlu0 %v274
    %v550 = vpop.xlane.xlu0 %549
    %551 = vadd.xlane.f32.xlu0 %v277
    %v552 = vpop.xlane.xlu0 %551
    %553 = vadd.xlane.f32.xlu0 %v282
    %v554 = vpop.xlane.xlu0 %553
    %555 = vadd.xlane.f32.xlu0 %v285
    %v556 = vpop.xlane.xlu0 %555
    %557 = vadd.xlane.f32.xlu0 %v290
    %v558 = vpop.xlane.xlu0 %557
    %559 = vadd.xlane.f32.xlu0 %v293
    %v560 = vpop.xlane.xlu0 %559
    %561 = vadd.xlane.f32.xlu0 %v298
    %v562 = vpop.xlane.xlu0 %561
    %563 = vadd.xlane.f32.xlu0 %v301
    %v564 = vpop.xlane.xlu0 %563
    %565 = vadd.xlane.f32.xlu0 %v306
    %v566 = vpop.xlane.xlu0 %565
    %567 = vadd.xlane.f32.xlu0 %v309
    %v568 = vpop.xlane.xlu0 %567
    %569 = vadd.xlane.f32.xlu0 %v314
    %v570 = vpop.xlane.xlu0 %569
    %571 = vadd.xlane.f32.xlu0 %v317
    %v572 = vpop.xlane.xlu0 %571
    %573 = vadd.xlane.f32.xlu0 %v322
    %v574 = vpop.xlane.xlu0 %573
    %575 = vadd.xlane.f32.xlu0 %v325
    %v576 = vpop.xlane.xlu0 %575
    %v577 = vmul.f32 %v530, 0.0078125
    %v578 = vmul.f32 %v532, 0.0078125
    %v579 = vmul.f32 %v534, 0.0078125
    %v580 = vmul.f32 %v536, 0.0078125
    %v581 = vmul.f32 %v538, 0.0078125
    %v582 = vmul.f32 %v540, 0.0078125
    %v583 = vmul.f32 %v542, 0.0078125
    %v584 = vmul.f32 %v544, 0.0078125
    %v585 = vmul.f32 %v546, 0.0078125
    %v586 = vmul.f32 %v548, 0.0078125
    %v587 = vmul.f32 %v550, 0.0078125
    %v588 = vmul.f32 %v552, 0.0078125
    %v589 = vmul.f32 %v554, 0.0078125
    %v590 = vmul.f32 %v556, 0.0078125
    %v591 = vmul.f32 %v558, 0.0078125
    %v592 = vmul.f32 %v560, 0.0078125
    %v593 = vmul.f32 %v562, 0.0078125
    %v594 = vmul.f32 %v564, 0.0078125
    %v595 = vmul.f32 %v566, 0.0078125
    %v596 = vmul.f32 %v568, 0.0078125
    %v597 = vmul.f32 %v570, 0.0078125
    %v598 = vmul.f32 %v572, 0.0078125
    %v599 = vmul.f32 %v574, 0.0078125
    %v600 = vmul.f32 %v576, 0.0078125
    %601 = vadd.xlane.f32.xlu0 %v435
    %v602 = vpop.xlane.xlu0 %601
    %603 = vadd.xlane.f32.xlu0 %v438
    %v604 = vpop.xlane.xlu0 %603
    %605 = vadd.xlane.f32.xlu0 %v443
    %v606 = vpop.xlane.xlu0 %605
    %607 = vadd.xlane.f32.xlu0 %v446
    %v608 = vpop.xlane.xlu0 %607
    %609 = vadd.xlane.f32.xlu0 %v451
    %v610 = vpop.xlane.xlu0 %609
    %611 = vadd.xlane.f32.xlu0 %v454
    %v612 = vpop.xlane.xlu0 %611
    %613 = vadd.xlane.f32.xlu0 %v459
    %v614 = vpop.xlane.xlu0 %613
    %615 = vadd.xlane.f32.xlu0 %v462
    %v616 = vpop.xlane.xlu0 %615
    %617 = vadd.xlane.f32.xlu0 %v467
    %v618 = vpop.xlane.xlu0 %617
    %619 = vadd.xlane.f32.xlu0 %v470
    %v620 = vpop.xlane.xlu0 %619
    %621 = vadd.xlane.f32.xlu0 %v475
    %v622 = vpop.xlane.xlu0 %621
    %623 = vadd.xlane.f32.xlu0 %v478
    %v624 = vpop.xlane.xlu0 %623
    %625 = vadd.xlane.f32.xlu0 %v483
    %v626 = vpop.xlane.xlu0 %625
    %627 = vadd.xlane.f32.xlu0 %v486
    %v628 = vpop.xlane.xlu0 %627
    %629 = vadd.xlane.f32.xlu0 %v491
    %v630 = vpop.xlane.xlu0 %629
    %631 = vadd.xlane.f32.xlu0 %v494
    %v632 = vpop.xlane.xlu0 %631
    %633 = vadd.xlane.f32.xlu0 %v499
    %v634 = vpop.xlane.xlu0 %633
    %635 = vadd.xlane.f32.xlu0 %v502
    %v636 = vpop.xlane.xlu0 %635
    %637 = vadd.xlane.f32.xlu0 %v507
    %v638 = vpop.xlane.xlu0 %637
    %639 = vadd.xlane.f32.xlu0 %v510
    %v640 = vpop.xlane.xlu0 %639
    %641 = vadd.xlane.f32.xlu0 %v515
    %v642 = vpop.xlane.xlu0 %641
    %643 = vadd.xlane.f32.xlu0 %v518
    %v644 = vpop.xlane.xlu0 %643
    %645 = vadd.xlane.f32.xlu0 %v523
    %v646 = vpop.xlane.xlu0 %645
    %647 = vadd.xlane.f32.xlu0 %v526
    %v648 = vpop.xlane.xlu0 %647
    %v649 = vmul.f32 %v602, 0.0078125
    %v650 = vmul.f32 %v604, 0.0078125
    %v651 = vmul.f32 %v606, 0.0078125
    %v652 = vmul.f32 %v608, 0.0078125
    %v653 = vmul.f32 %v610, 0.0078125
    %v654 = vmul.f32 %v612, 0.0078125
    %v655 = vmul.f32 %v614, 0.0078125
    %v656 = vmul.f32 %v616, 0.0078125
    %v657 = vmul.f32 %v618, 0.0078125
    %v658 = vmul.f32 %v620, 0.0078125
    %v659 = vmul.f32 %v622, 0.0078125
    %v660 = vmul.f32 %v624, 0.0078125
    %v661 = vmul.f32 %v626, 0.0078125
    %v662 = vmul.f32 %v628, 0.0078125
    %v663 = vmul.f32 %v630, 0.0078125
    %v664 = vmul.f32 %v632, 0.0078125
    %v665 = vmul.f32 %v634, 0.0078125
    %v666 = vmul.f32 %v636, 0.0078125
    %v667 = vmul.f32 %v638, 0.0078125
    %v668 = vmul.f32 %v640, 0.0078125
    %v669 = vmul.f32 %v642, 0.0078125
    %v670 = vmul.f32 %v644, 0.0078125
    %v671 = vmul.f32 %v646, 0.0078125
    %v672 = vmul.f32 %v648, 0.0078125
    %v673 = vmax.f32 %v649, 1e-24
    %v674 = vmax.f32 %v650, 1e-24
    %v675 = vmax.f32 %v651, 1e-24
    %v676 = vmax.f32 %v652, 1e-24
    %v677 = vmax.f32 %v653, 1e-24
    %v678 = vmax.f32 %v654, 1e-24
    %v679 = vmax.f32 %v655, 1e-24
    %v680 = vmax.f32 %v656, 1e-24
    %v681 = vmax.f32 %v657, 1e-24
    %v682 = vmax.f32 %v658, 1e-24
    %v683 = vmax.f32 %v659, 1e-24
    %v684 = vmax.f32 %v660, 1e-24
    %v685 = vmax.f32 %v661, 1e-24
    %v686 = vmax.f32 %v662, 1e-24
    %v687 = vmax.f32 %v663, 1e-24
    %v688 = vmax.f32 %v664, 1e-24
    %v689 = vmax.f32 %v665, 1e-24
    %v690 = vmax.f32 %v666, 1e-24
    %v691 = vmax.f32 %v667, 1e-24
    %v692 = vmax.f32 %v668, 1e-24
    %v693 = vmax.f32 %v669, 1e-24
    %v694 = vmax.f32 %v670, 1e-24
    %v695 = vmax.f32 %v671, 1e-24
    %v696 = vmax.f32 %v672, 1e-24
    %v697 = vrsqrt.pop %v673
    %v698 = vrsqrt.pop %v674
    %v699 = vrsqrt.pop %v675
    %v700 = vrsqrt.pop %v676
    %v701 = vrsqrt.pop %v677
    %v702 = vrsqrt.pop %v678
    %v703 = vrsqrt.pop %v679
    %v704 = vrsqrt.pop %v680
    %v705 = vrsqrt.pop %v681
    %v706 = vrsqrt.pop %v682
    %v707 = vrsqrt.pop %v683
    %v708 = vrsqrt.pop %v684
    %v709 = vrsqrt.pop %v685
    %v710 = vrsqrt.pop %v686
    %v711 = vrsqrt.pop %v687
    %v712 = vrsqrt.pop %v688
    %v713 = vrsqrt.pop %v689
    %v714 = vrsqrt.pop %v690
    %v715 = vrsqrt.pop %v691
    %v716 = vrsqrt.pop %v692
    %v717 = vrsqrt.pop %v693
    %v718 = vrsqrt.pop %v694
    %v719 = vrsqrt.pop %v695
    %v720 = vrsqrt.pop %v696
    %v721 = vmul.f32 %v577, %v697
    %v722 = vmul.f32 %v578, %v698
    %v723 = vmul.f32 %v579, %v699
    %v724 = vmul.f32 %v580, %v700
    %v725 = vmul.f32 %v581, %v701
    %v726 = vmul.f32 %v582, %v702
    %v727 = vmul.f32 %v583, %v703
    %v728 = vmul.f32 %v584, %v704
    %v729 = vmul.f32 %v585, %v705
    %v730 = vmul.f32 %v586, %v706
    %v731 = vmul.f32 %v587, %v707
    %v732 = vmul.f32 %v588, %v708
    %v733 = vmul.f32 %v589, %v709
    %v734 = vmul.f32 %v590, %v710
    %v735 = vmul.f32 %v591, %v711
    %v736 = vmul.f32 %v592, %v712
    %v737 = vmul.f32 %v593, %v713
    %v738 = vmul.f32 %v594, %v714
    %v739 = vmul.f32 %v595, %v715
    %v740 = vmul.f32 %v596, %v716
    %v741 = vmul.f32 %v597, %v717
    %v742 = vmul.f32 %v598, %v718
    %v743 = vmul.f32 %v599, %v719
    %v744 = vmul.f32 %v600, %v720
    %v745 = vld [vmem:[#allocation2] sm:$0x7]
    %v770 = vlaneseq
    %v771 = vand.u32 %v770, 127
    %v772 = vlaneseq
    %v773 = vshrl.u32 %v772, 7
    %v774 = vsub.s32 %v771, %v773
    %v775 = vrot.slane %v721, %v774
    %v776 = vadd.s32 %v771, 4294967288
    %v777 = vlaneseq
    %v778 = vshrl.u32 %v777, 7
    %v779 = vsub.s32 %v776, %v778
    %v780 = vrot.slane %v722, %v779
    %vm781 = vcmask 130112
    %v782 = vsel %vm781, %v780, %v775
    %v783 = vadd.s32 %v771, 4294967280
    %v784 = vlaneseq
    %v785 = vshrl.u32 %v784, 7
    %v786 = vsub.s32 %v783, %v785
    %v787 = vrot.slane %v723, %v786
    %vm788 = vcmask 195712
    %v789 = vsel %vm788, %v787, %v782
    %v790 = vadd.s32 %v771, 4294967272
    %v791 = vlaneseq
    %v792 = vshrl.u32 %v791, 7
    %v793 = vsub.s32 %v790, %v792
    %v794 = vrot.slane %v724, %v793
    %vm795 = vcmask 261312
    %v796 = vsel %vm795, %v794, %v789
    %v797 = vadd.s32 %v771, 4294967264
    %v798 = vlaneseq
    %v799 = vshrl.u32 %v798, 7
    %v800 = vsub.s32 %v797, %v799
    %v801 = vrot.slane %v725, %v800
    %vm802 = vcmask 326912
    %v803 = vsel %vm802, %v801, %v796
    %v804 = vadd.s32 %v771, 4294967256
    %v805 = vlaneseq
    %v806 = vshrl.u32 %v805, 7
    %v807 = vsub.s32 %v804, %v806
    %v808 = vrot.slane %v726, %v807
    %vm809 = vcmask 392512
    %v810 = vsel %vm809, %v808, %v803
    %v811 = vadd.s32 %v771, 4294967248
    %v812 = vlaneseq
    %v813 = vshrl.u32 %v812, 7
    %v814 = vsub.s32 %v811, %v813
    %v815 = vrot.slane %v727, %v814
    %vm816 = vcmask 458112
    %v817 = vsel %vm816, %v815, %v810
    %v818 = vadd.s32 %v771, 4294967240
    %v819 = vlaneseq
    %v820 = vshrl.u32 %v819, 7
    %v821 = vsub.s32 %v818, %v820
    %v822 = vrot.slane %v728, %v821
    %vm823 = vcmask 523712
    %v824 = vsel %vm823, %v822, %v817
    %v825 = vlaneseq
    %v826 = vshrl.u32 %v825, 7
    %v827 = vsub.s32 %v771, %v826
    %v828 = vrot.slane %v729, %v827
    %v829 = vlaneseq
    %v830 = vshrl.u32 %v829, 7
    %v831 = vsub.s32 %v776, %v830
    %v832 = vrot.slane %v730, %v831
    %v833 = vsel %vm781, %v832, %v828
    %v834 = vlaneseq
    %v835 = vshrl.u32 %v834, 7
    %v836 = vsub.s32 %v783, %v835
    %v837 = vrot.slane %v731, %v836
    %v838 = vsel %vm788, %v837, %v833
    %v839 = vlaneseq
    %v840 = vshrl.u32 %v839, 7
    %v841 = vsub.s32 %v790, %v840
    %v842 = vrot.slane %v732, %v841
    %v843 = vsel %vm795, %v842, %v838
    %v844 = vlaneseq
    %v845 = vshrl.u32 %v844, 7
    %v846 = vsub.s32 %v797, %v845
    %v847 = vrot.slane %v733, %v846
    %v848 = vsel %vm802, %v847, %v843
    %v849 = vlaneseq
    %v850 = vshrl.u32 %v849, 7
    %v851 = vsub.s32 %v804, %v850
    %v852 = vrot.slane %v734, %v851
    %v853 = vsel %vm809, %v852, %v848
    %v854 = vlaneseq
    %v855 = vshrl.u32 %v854, 7
    %v856 = vsub.s32 %v811, %v855
    %v857 = vrot.slane %v735, %v856
    %v858 = vsel %vm816, %v857, %v853
    %v859 = vlaneseq
    %v860 = vshrl.u32 %v859, 7
    %v861 = vsub.s32 %v818, %v860
    %v862 = vrot.slane %v736, %v861
    %v863 = vsel %vm823, %v862, %v858
    %v864 = vlaneseq
    %v865 = vshrl.u32 %v864, 7
    %v866 = vsub.s32 %v771, %v865
    %v867 = vrot.slane %v737, %v866
    %v868 = vlaneseq
    %v869 = vshrl.u32 %v868, 7
    %v870 = vsub.s32 %v776, %v869
    %v871 = vrot.slane %v738, %v870
    %v872 = vsel %vm781, %v871, %v867
    %v873 = vlaneseq
    %v874 = vshrl.u32 %v873, 7
    %v875 = vsub.s32 %v783, %v874
    %v876 = vrot.slane %v739, %v875
    %v877 = vsel %vm788, %v876, %v872
    %v878 = vlaneseq
    %v879 = vshrl.u32 %v878, 7
    %v880 = vsub.s32 %v790, %v879
    %v881 = vrot.slane %v740, %v880
    %v882 = vsel %vm795, %v881, %v877
    %v883 = vlaneseq
    %v884 = vshrl.u32 %v883, 7
    %v885 = vsub.s32 %v797, %v884
    %v886 = vrot.slane %v741, %v885
    %v887 = vsel %vm802, %v886, %v882
    %v888 = vlaneseq
    %v889 = vshrl.u32 %v888, 7
    %v890 = vsub.s32 %v804, %v889
    %v891 = vrot.slane %v742, %v890
    %v892 = vsel %vm809, %v891, %v887
    %v893 = vlaneseq
    %v894 = vshrl.u32 %v893, 7
    %v895 = vsub.s32 %v811, %v894
    %v896 = vrot.slane %v743, %v895
    %v897 = vsel %vm816, %v896, %v892
    %v898 = vlaneseq
    %v899 = vshrl.u32 %v898, 7
    %v900 = vsub.s32 %v818, %v899
    %v901 = vrot.slane %v744, %v900
    %v902 = vsel %vm823, %v901, %v897
    %vm903 = vcmask 1041409
    %v904 = vsel %vm903, %v863, %v824
    %vm905 = vcmask 1042434
    %v906 = vsel %vm905, %v902, %v904
    %vm908 = vcmask 518144
    %v909 = vsel %vm908, %v906, 0.0
    %910 = vadd.xlane.f32.xlu0 %v909
    %v911 = vpop.xlane.xlu0 %910
    %v912 = vadd.f32 %v745, %v911
    %vm913 = vcmask 2048
    %914 = vst.msk [vmem:[#allocation2] sm:$0x7] %vm913, %v912
    // Predicated region
    $region22: #{tpu_custom_call.1} parent=1 // pred_check
      %p915 = pneg %p41
    $region23: #{tpu_custom_call.1} parent=1 // pred_check_branch
      %917 = sbr.rel (%p915) target = $region25
    $region24: #{tpu_custom_call.1} parent=1 // pred_region
      %v918 = vld [vmem:[#allocation2] sm:$0x7]
      %v919 = vmul.f32 %v918, 0.015625
      %920 = vst.msk [vmem:[%s2] sm:$0x7] %vm913, %v919
    $region25: #{tpu_custom_call.1} parent=1 // pred_fallthru
      _
    // Predicated region
    $region26: #{tpu_custom_call.1} parent=1 // pred_check
      _
    $region27: #{tpu_custom_call.1} parent=1 // pred_check_branch
      %922 = sbr.rel (0) target = $region29
    $region28: #{tpu_custom_call.1} parent=1 // pred_region
      _
    $region29: #{tpu_custom_call.1} parent=1 // pred_fallthru
      _
    // Predicated region
    $region30: #{tpu_custom_call.1} parent=1 // pred_check
      _
    $region31: #{tpu_custom_call.1} parent=1 // pred_check_branch
      %924 = sbr.rel (0) target = $region33
    $region32: #{tpu_custom_call.1} parent=1 // pred_region
      _
    $region33: #{tpu_custom_call.1} parent=1 // pred_fallthru
      _
    %925 = vsyncpa [#allocation4], 1
    %926 = vsyncpa [#allocation6], 1

</llo_original>
